<compile_context>
chip_gen: v7x
topology: tpu7x:2x2x1
jax: 0.10.0
libtpu: 0.0.40
codegen_flags: <defaults>
</compile_context>

<pallas_src>
import jax
import jax.numpy as jnp
from jax.experimental import pallas as pl
from jax.experimental.pallas import tpu as pltpu

D = 64                         # feature dim of MLP_ODE's ConcatLinear(64, 64)
DP = 2 * D                     # lane-packed width (two rows per 128-lane vreg row)
TB_MAX = 4096                  # packed-row tile: 4096*128*4B = 2 MiB per f32 buffer
INTEGRATION_RIGHT_LIMIT = 1.0


def _round_up(x, m):
    return (x + m - 1) // m * m


def _pick_tile(bp):
    """Packed-row tile size.

    * bp <= 8: one block equal to the full array (legal since block == array dims).
    * otherwise: the largest multiple of 8 that is <= TB_MAX and still leaves
      >= 2 grid steps (amortizes the ~0.35 us/step overhead while keeping both
      v7x TensorCores busy and the double-buffer pipeline alive).
    """
    if bp <= 8:
        return bp
    return min(TB_MAX, max(8, _round_up((bp + 1) // 2, 8)))


def _ode_euler_kernel(x_ref, w_ref, b_ref, out_ref):
    """Fused Euler step on a lane-packed batch tile: out = x @ Weff + beff."""
    out_ref[...] = (
        jnp.dot(x_ref[...], w_ref[...], preferred_element_type=jnp.float32)
        + b_ref[...]
    ).astype(out_ref.dtype)


def prepare_params(weight, bias, t0=0.0):
    """Host-side parameter prep.  Do ONCE per parameter set, not per call.

    weight: [64, 65] (nn.Linear(65, 64).weight, [out, in]);  bias: [64].
    Returns the lane-packed weight W2 = block_diag(W[:,1:].T, W[:,1:].T)
    ([128, 128]) and the lane-packed effective bias b2 ([1, 128]) with the time
    column folded in (t0 = 0 for this module, so that term vanishes).
    """
    weight = jnp.asarray(weight, jnp.float32)
    bias = jnp.asarray(bias, jnp.float32)
    wxT = weight[:, 1:].T                                   # [D_in, D_out] = [64, 64]
    b_eff = bias + t0 * weight[:, 0]                        # [64]
    W2 = jnp.zeros((DP, DP), jnp.float32)
    W2 = W2.at[:D, :D].set(wxT).at[D:, D:].set(wxT)         # block_diag(wxT, wxT)
    b2 = jnp.tile(b_eff, (2,)).reshape(1, DP)               # [1, 128]
    return W2, b2


@jax.jit
def mlp_ode_forward(state, W2, b2, dt):
    """out = state + dt * (state @ W.T + b);  state: [B, 64] float32."""
    B, d = state.shape
    assert d == D and W2.shape == (DP, DP) and b2.shape == (1, DP)

    # Fold the Euler update into the matmul (tiny 128x128 XLA op, traced dt).
    dt = jnp.asarray(dt, jnp.float32)
    w_eff = jnp.eye(DP, dtype=jnp.float32) + dt * W2
    b_eff = dt * b2

    # Lane-pack two 64-wide rows into one 128-lane row.  Even B (hot path) is a
    # free contiguous reshape; odd B pays a single one-row concat.
    if B % 2 != 0:
        state = jnp.concatenate([state, jnp.zeros((1, D), state.dtype)], axis=0)
    bp = state.shape[0] // 2
    xp = state.reshape(bp, DP)

    tb = _pick_tile(bp)
    grid = (pl.cdiv(bp, tb),)            # partial last block is masked by Pallas

    out = pl.pallas_call(
        _ode_euler_kernel,
        out_shape=jax.ShapeDtypeStruct((bp, DP), jnp.float32),
        grid_spec=pltpu.PrefetchScalarGridSpec(
            num_scalar_prefetch=0,
            grid=grid,
            in_specs=[
                pl.BlockSpec((tb, DP), lambda i: (i, 0)),   # packed state stream
                pl.BlockSpec((DP, DP), lambda i: (0, 0)),   # Weff (VMEM-resident)
                pl.BlockSpec((1, DP), lambda i: (0, 0)),    # beff (VMEM-resident)
            ],
            out_specs=pl.BlockSpec((tb, DP), lambda i: (i, 0)),
        ),
        compiler_params=pltpu.CompilerParams(
            dimension_semantics=("parallel",)),   # shards steps across TCs on v7x
    )(xp, w_eff, b_eff)

    out = out.reshape(2 * bp, D)
    if B % 2 != 0:
        out = out[:B]
    return out


if __name__ == "__main__":
    key = jax.random.PRNGKey(0)
    k_state, k_w, k_b = jax.random.split(key, 3)

    B = 8
    state = jax.random.normal(k_state, (B, D), dtype=jnp.float32)

    # Deterministic synthetic parameters for nn.Linear(65, 64):
    # weight [64, 65], bias [64], uniform(-1/sqrt(fan_in), 1/sqrt(fan_in)).
    bound = 1.0 / jnp.sqrt(jnp.float32(D + 1))
    weight = jax.random.uniform(k_w, (D, D + 1), dtype=jnp.float32,
                                minval=-bound, maxval=bound)
    bias = jax.random.uniform(k_b, (D,), dtype=jnp.float32,
                              minval=-bound, maxval=bound)

    W2, b2 = prepare_params(weight, bias, t0=0.0)   # cached across calls
    out = mlp_ode_forward(state, W2, b2, INTEGRATION_RIGHT_LIMIT)
    out = jax.block_until_ready(out)

    # Pure-JAX reference of the same math (single Euler step, t0 = 0).
    t0 = 0.0
    f_ref = t0 * weight[:, 0][None, :] + state @ weight[:, 1:].T + bias[None, :]
    ref = state + INTEGRATION_RIGHT_LIMIT * f_ref

    assert out.shape == (B, D) and out.dtype == jnp.float32
    assert jnp.allclose(out, ref, atol=1e-4, rtol=1e-4)
    print("KERNEL_OK")
</pallas_src>

<mosaic_0001>
module attributes {stable_mosaic.version = 11 : i64} {
  func.func @_ode_euler_kernel(%arg0: i32, %arg1: memref<4x128xf32, #tpu.memory_space<vmem>>, %arg2: memref<128x128xf32, #tpu.memory_space<vmem>>, %arg3: memref<1x128xf32, #tpu.memory_space<vmem>>, %arg4: memref<4x128xf32, #tpu.memory_space<vmem>>) attributes {dimension_semantics = [#tpu.dimension_semantics<parallel>], iteration_bounds = array<i64: 1>, scalar_prefetch = 0 : i64, scratch_operands = 0 : i64, tpu.core_type = #tpu.core_type<tc>, window_params = [{transform_indices = @transform_0, window_bounds = array<i64: 4, 128>}, {pipeline_mode = #tpu.pipeline_mode<synchronous>, transform_indices = @transform_1, window_bounds = array<i64: 128, 128>}, {pipeline_mode = #tpu.pipeline_mode<synchronous>, transform_indices = @transform_2, window_bounds = array<i64: 1, 128>}, {transform_indices = @transform_3, window_bounds = array<i64: 4, 128>}]} {
    %c0 = arith.constant 0 : index
    %c0_0 = arith.constant 0 : index
    %0 = vector.load %arg1[%c0, %c0_0] : memref<4x128xf32, #tpu.memory_space<vmem>>, vector<4x128xf32>
    %c0_1 = arith.constant 0 : index
    %c0_2 = arith.constant 0 : index
    %1 = vector.load %arg2[%c0_1, %c0_2] : memref<128x128xf32, #tpu.memory_space<vmem>>, vector<128x128xf32>
    %cst = arith.constant dense<0.000000e+00> : vector<4x128xf32>
    %2 = tpu.matmul %0, %1, %cst {dimension_numbers = #tpu.dot_dimension_numbers<[1], [0], [0], [1], [0, 0, 1, 1], [], []>} : vector<4x128xf32>, vector<128x128xf32>, vector<4x128xf32> -> vector<4x128xf32>
    %c0_3 = arith.constant 0 : index
    %c0_4 = arith.constant 0 : index
    %3 = vector.load %arg3[%c0_3, %c0_4] : memref<1x128xf32, #tpu.memory_space<vmem>>, vector<1x128xf32>
    %4 = vector.broadcast %3 : vector<1x128xf32> to vector<4x128xf32>
    %5 = arith.addf %2, %4 : vector<4x128xf32>
    %c0_5 = arith.constant 0 : index
    %c0_6 = arith.constant 0 : index
    %6 = vector.load %arg4[%c0_5, %c0_6] : memref<4x128xf32, #tpu.memory_space<vmem>>, vector<4x128xf32>
    tpu.vector_store %arg4[%c0_5, %c0_6], %5 {strides = array<i32>} : memref<4x128xf32, #tpu.memory_space<vmem>>, vector<4x128xf32>,
    return
  }
  func.func @transform_0(%arg0: i32) -> (i32, i32) {
    %c0_i32 = arith.constant 0 : i32
    %c0_i32_0 = arith.constant 0 : i32
    return %arg0, %c0_i32 : i32, i32
  }
  func.func @transform_1(%arg0: i32) -> (i32, i32) {
    %c0_i32 = arith.constant 0 : i32
    %c0_i32_0 = arith.constant 0 : i32
    %c0_i32_1 = arith.constant 0 : i32
    return %c0_i32, %c0_i32_0 : i32, i32
  }
  func.func @transform_2(%arg0: i32) -> (i32, i32) {
    %c0_i32 = arith.constant 0 : i32
    %c0_i32_0 = arith.constant 0 : i32
    %c0_i32_1 = arith.constant 0 : i32
    return %c0_i32, %c0_i32_0 : i32, i32
  }
  func.func @transform_3(%arg0: i32) -> (i32, i32) {
    %c0_i32 = arith.constant 0 : i32
    %c0_i32_0 = arith.constant 0 : i32
    return %arg0, %c0_i32 : i32, i32
  }
}

</mosaic_0001>

<llo_original>
// kernel: mlp_ode_forward.1
$region0: #{mlp_ode_forward.1}
  #allocation0 [shape = 'u32[]', space=smem, size = 0x4, offset = 0x4, fixed_abs, tag = 'smem constant byte address 0x4 - core index']
  #allocation1 [shape = 'u32[144,128]{1,0:T(1,128)}', space=vmem, size = 0x12000, scoped, tag = 'internal scratch']
  %s0 = inlined_call_operand.vmem [shape: f32[4,128], index: 0, kind: input, shape index: {}]
  %s1 = inlined_call_operand.vmem [shape: f32[128,128], index: 1, kind: input, shape index: {}]
  %s2 = inlined_call_operand.vmem [shape: f32[1,128], index: 2, kind: input, shape index: {}]
  %s3 = inlined_call_operand.vmem [shape: f32[4,128], index: 3, kind: output, shape index: {}]
  %s4 = sld [smem:[#allocation0]]
  $region22: #{mlp_ode_forward.1} parent=0
    _
  %s6 = ssub.s32 1, %s4
  %s7 = scalar_select 0, %s6, %s4
  // Predicated region
  $region2: #{mlp_ode_forward.1} parent=0 // pred_check
    _
  $region3: #{mlp_ode_forward.1} parent=0 // pred_check_branch
    %9 = sbr.rel (0) target = $region5
  $region4: #{mlp_ode_forward.1} parent=0 // pred_region
    _
  $region5: #{mlp_ode_forward.1} parent=0 // pred_fallthru
    _
  // Predicated region
  $region6: #{mlp_ode_forward.1} parent=0 // pred_check
    _
  $region7: #{mlp_ode_forward.1} parent=0 // pred_check_branch
    %11 = sbr.rel (0) target = $region9
  $region8: #{mlp_ode_forward.1} parent=0 // pred_region
    _
  $region9: #{mlp_ode_forward.1} parent=0 // pred_fallthru
    _
  // Predicated region
  $region10: #{mlp_ode_forward.1} parent=0 // pred_check
    _
  $region11: #{mlp_ode_forward.1} parent=0 // pred_check_branch
    %13 = sbr.rel (0) target = $region13
  $region12: #{mlp_ode_forward.1} parent=0 // pred_region
    _
  $region13: #{mlp_ode_forward.1} parent=0 // pred_fallthru
    _
  %v14 = vld [vmem:[%s0] sm:$0xf]
  %v15 = vld [vmem:[%s1] sm:$0xff]
  %v16 = vld [vmem:[%s1 + $0x8] sm:$0xff]
  %v17 = vld [vmem:[%s1 + $0x10] sm:$0xff]
  %v18 = vld [vmem:[%s1 + $0x18] sm:$0xff]
  %v19 = vld [vmem:[%s1 + $0x20] sm:$0xff]
  %v20 = vld [vmem:[%s1 + $0x28] sm:$0xff]
  %v21 = vld [vmem:[%s1 + $0x30] sm:$0xff]
  %v22 = vld [vmem:[%s1 + $0x38] sm:$0xff]
  %v23 = vld [vmem:[%s1 + $0x40] sm:$0xff]
  %v24 = vld [vmem:[%s1 + $0x48] sm:$0xff]
  %v25 = vld [vmem:[%s1 + $0x50] sm:$0xff]
  %v26 = vld [vmem:[%s1 + $0x58] sm:$0xff]
  %v27 = vld [vmem:[%s1 + $0x60] sm:$0xff]
  %v28 = vld [vmem:[%s1 + $0x68] sm:$0xff]
  %v29 = vld [vmem:[%s1 + $0x70] sm:$0xff]
  %v30 = vld [vmem:[%s1 + $0x78] sm:$0xff]
  %v31 = vld [vmem:[%s2] sm:$0x1]
  %v33 = vlaneseq
  %v34 = vshrl.u32 %v33, 7
  %v35 = vsub.s32 0, %v34
  %v36 = vrot.slane %v31, %v35
  %38 = vmatprep.subr.mxu0 0.0
  %39 = vmatpush1.msra.mxu0 %v15
  %40 = vmatprep.subr.mxu0 0.0
  %41 = vmatpush1.msra.mxu0 %v16
  %42 = vmatprep.subr.mxu0 0.0
  %43 = vmatpush1.msra.mxu0 %v17
  %44 = vmatprep.subr.mxu0 0.0
  %45 = vmatpush1.msra.mxu0 %v18
  %46 = vmatprep.subr.mxu0 0.0
  %47 = vmatpush1.msra.mxu0 %v19
  %48 = vmatprep.subr.mxu0 0.0
  %49 = vmatpush1.msra.mxu0 %v20
  %50 = vmatprep.subr.mxu0 0.0
  %51 = vmatpush1.msra.mxu0 %v21
  %52 = vmatprep.subr.mxu0 0.0
  %53 = vmatpush1.msra.mxu0 %v22
  %54 = vmatprep.subr.mxu0 0.0
  %55 = vmatpush1.msra.mxu0 %v23
  %56 = vmatprep.subr.mxu0 0.0
  %57 = vmatpush1.msra.mxu0 %v24
  %58 = vmatprep.subr.mxu0 0.0
  %59 = vmatpush1.msra.mxu0 %v25
  %60 = vmatprep.subr.mxu0 0.0
  %61 = vmatpush1.msra.mxu0 %v26
  %62 = vmatprep.subr.mxu0 0.0
  %63 = vmatpush1.msra.mxu0 %v27
  %64 = vmatprep.subr.mxu0 0.0
  %65 = vmatpush1.msra.mxu0 %v28
  %66 = vmatprep.subr.mxu0 0.0
  %67 = vmatpush1.msra.mxu0 %v29
  %68 = vmatprep.subr.mxu0 0.0
  %69 = vmatpush1.msra.mxu0 %v30
  %70 = vmatprep.subr.mxu0 0.0
  %71 = vmatpush1.msra.mxu0 0.0
  %72 = vmatprep.subr.mxu0 0.0
  %73 = vmatpush1.msra.mxu0 0.0
  %74 = vmatprep.subr.mxu0 0.0
  %75 = vmatpush1.msra.mxu0 0.0
  %76 = vmatprep.subr.mxu0 0.0
  %77 = vmatpush1.msra.mxu0 0.0
  %78 = vmatprep.subr.mxu0 0.0
  %79 = vmatpush1.msra.mxu0 0.0
  %80 = vmatprep.subr.mxu0 0.0
  %81 = vmatpush1.msra.mxu0 0.0
  %82 = vmatprep.subr.mxu0 0.0
  %83 = vmatpush1.msra.mxu0 0.0
  %84 = vmatprep.subr.mxu0 0.0
  %85 = vmatpush1.msra.mxu0 0.0
  %86 = vmatprep.subr.mxu0 0.0
  %87 = vmatpush1.msra.mxu0 0.0
  %88 = vmatprep.subr.mxu0 0.0
  %89 = vmatpush1.msra.mxu0 0.0
  %90 = vmatprep.subr.mxu0 0.0
  %91 = vmatpush1.msra.mxu0 0.0
  %92 = vmatprep.subr.mxu0 0.0
  %93 = vmatpush1.msra.mxu0 0.0
  %94 = vmatprep.subr.mxu0 0.0
  %95 = vmatpush1.msra.mxu0 0.0
  %96 = vmatprep.subr.mxu0 0.0
  %97 = vmatpush1.msra.mxu0 0.0
  %98 = vmatprep.subr.mxu0 0.0
  %99 = vmatpush1.msra.mxu0 0.0
  %100 = vmatprep.subr.mxu0 0.0
  %101 = vmatpush1.msra.mxu0 0.0
  %102 = vmatprep.mubr.f32.mxu0 0.0
  %103 = vmatmul.mubr.f32.gmra.mrb[0].mxu0 %v14
  %v104 = vpop.f32.mrb[0].mxu0
  %v105 = vadd.f32 %v36, %v104
  %v106 = vpop.f32.mrb[0].mxu0
  %107 = vdwg.mxu0
  %108 = vst [vmem:[%s3] sm:$0xf] %v105
  // Predicated region
  $region14: #{mlp_ode_forward.1} parent=0 // pred_check
    _
  $region15: #{mlp_ode_forward.1} parent=0 // pred_check_branch
    %110 = sbr.rel (0) target = $region17
  $region16: #{mlp_ode_forward.1} parent=0 // pred_region
    _
  $region17: #{mlp_ode_forward.1} parent=0 // pred_fallthru
    _
  // Predicated region
  $region18: #{mlp_ode_forward.1} parent=0 // pred_check
    _
  $region19: #{mlp_ode_forward.1} parent=0 // pred_check_branch
    %112 = sbr.rel (0) target = $region21
  $region20: #{mlp_ode_forward.1} parent=0 // pred_region
    _
  $region21: #{mlp_ode_forward.1} parent=0 // pred_fallthru
    _

</llo_original>
